<compile_context>
chip_gen: v7x
topology: tpu7x:2x2x1
jax: 0.10.0
libtpu: 0.0.40
codegen_flags: <defaults>
</compile_context>

<pallas_src>
import jax
import jax.numpy as jnp
from jax.experimental import pallas as pl
from jax.experimental.pallas import tpu as pltpu

NUM_STATE = 115
HIDDEN = 64
TB_TARGET = 4096    # batch-tile target; sweepable 2048 (v5e) .. 8192 (v7x, big B)


def _round_up(n, m):
    return ((n + m - 1) // m) * m


def critic_kernel(x_ref, w1_ref, b1_ref, w2_ref, b2_ref, o_ref):
    # fc1: (TB,115) @ (115,64) -> f32 accumulate, + bias, ReLU.
    # Cast keeps the dot well-typed even if the caller hands us bf16 activations;
    # the kernel is HBM-bound so the f32 MXU path is free.
    x = x_ref[...].astype(jnp.float32)
    h = jnp.dot(x, w1_ref[...], preferred_element_type=jnp.float32)
    h = jnp.maximum(h + b1_ref[...], 0.0)                            # (TB, 64) f32

    # state_value head, transposed so batch lands on lanes (lane-dense store):
    #   (8,64) . (TB,64)^T -> (8,TB); row 0 is the real w2, rows 1..7 are zero.
    v8 = jax.lax.dot_general(
        w2_ref[...], h,
        dimension_numbers=(((1,), (1,)), ((), ())),
        preferred_element_type=jnp.float32)                          # (8, TB)

    v = v8[0:1, :] + b2_ref[0]                                       # (1, TB) f32
    o_ref[...] = v.reshape(o_ref.shape)


def _pick_tile(B, tb_target=TB_TARGET):
    """Batch-tile policy.

    * B <= 128: a single tile rounded up to the 8-row sublane granule.
    * Otherwise: at least 2 tiles (so v7x's second TensorCore gets work), sized
      to minimize padding for awkward B, and rounded to 128 rows so the head's
      output block stays lane-dense.
    """
    if B <= 128:
        return _round_up(max(B, 1), 8)
    n_tiles = max(2, pl.cdiv(B, tb_target))
    return _round_up(pl.cdiv(B, n_tiles), 128)


def critic_forward(x, w1, b1, w2, b2, *, tb=None):
    """x: (B,115); w1: (115,64); b1: (64,); w2: (64,); b2: () -> (B,1) f32.

    x is streamed untouched from HBM (f32 or bf16 both fine); all accumulation
    is f32 on the MXU.
    """
    B = x.shape[0]
    if tb is None:
        tb = _pick_tile(B)
    num_tiles = pl.cdiv(B, tb)

    # Tiny wrapper-side constants only (negligible); x itself is NOT copied.
    b1_p = b1.reshape(1, HIDDEN).astype(jnp.float32)
    w2_p = jnp.zeros((8, HIDDEN), jnp.float32).at[0].set(w2.astype(jnp.float32))
    b2_p = jnp.reshape(b2, (1,)).astype(jnp.float32)

    x_bytes = jnp.dtype(x.dtype).itemsize
    cost = pl.CostEstimate(
        flops=2 * B * NUM_STATE * HIDDEN + 2 * B * HIDDEN,
        transcendentals=0,
        bytes_accessed=B * (NUM_STATE * x_bytes + 4) + NUM_STATE * HIDDEN * 4,
    )

    out = pl.pallas_call(
        critic_kernel,
        out_shape=jax.ShapeDtypeStruct((num_tiles, 1, tb), jnp.float32),
        grid=(num_tiles,),
        in_specs=[
            pl.BlockSpec((tb, NUM_STATE), lambda i: (i, 0)),        # x: streamed
            pl.BlockSpec((NUM_STATE, HIDDEN), lambda i: (0, 0)),    # W1: resident
            pl.BlockSpec((1, HIDDEN), lambda i: (0, 0)),            # b1: resident
            pl.BlockSpec((8, HIDDEN), lambda i: (0, 0)),            # w2: resident
            pl.BlockSpec(memory_space=pltpu.MemorySpace.SMEM),      # b2: scalar
        ],
        out_specs=pl.BlockSpec((1, 1, tb), lambda i: (i, 0, 0)),    # lane-dense
        compiler_params=pltpu.CompilerParams(
            dimension_semantics=("parallel",)),
        cost_estimate=cost,
    )(x, w1, b1_p, w2_p, b2_p)

    # (num_tiles, 1, tb) row-major flatten == batch order; drop the (undefined)
    # rows of the final partial tile.
    return out.reshape(num_tiles * tb, 1)[:B]


def init_params(key):
    """PyTorch nn.Linear default init (uniform +-1/sqrt(fan_in)).
    Weights stored as [in, out] (transposed vs torch); w2 squeezed to (64,)."""
    k1, k2, k3, k4 = jax.random.split(key, 4)
    bound1 = 1.0 / jnp.sqrt(float(NUM_STATE))
    bound2 = 1.0 / jnp.sqrt(float(HIDDEN))
    w1 = jax.random.uniform(k1, (NUM_STATE, HIDDEN), jnp.float32, -bound1, bound1)
    b1 = jax.random.uniform(k2, (HIDDEN,), jnp.float32, -bound1, bound1)
    w2 = jax.random.uniform(k3, (HIDDEN,), jnp.float32, -bound2, bound2)
    b2 = jax.random.uniform(k4, (), jnp.float32, -bound2, bound2)
    return w1, b1, w2, b2


if __name__ == "__main__":
    key = jax.random.PRNGKey(0)
    kx, kp = jax.random.split(key)

    B = 8
    x = jax.random.normal(kx, (B, NUM_STATE), dtype=jnp.float32)
    w1, b1, w2, b2 = init_params(kp)

    value = critic_forward(x, w1, b1, w2, b2)
    value = jax.block_until_ready(value)

    # Reference check in plain f32 JAX (same math as the PyTorch forward).
    ref = jnp.maximum(x @ w1 + b1[None, :], 0.0) @ w2.reshape(HIDDEN, 1) + b2
    assert value.shape == (B, 1)
    assert jnp.allclose(value, ref, atol=2e-2, rtol=2e-2), float(
        jnp.max(jnp.abs(value - ref)))

    print("KERNEL_OK")
</pallas_src>

<mosaic_0001>
module attributes {stable_mosaic.version = 11 : i64} {
  func.func @critic_kernel(%arg0: i32, %arg1: memref<8x115xf32, #tpu.memory_space<vmem>>, %arg2: memref<115x64xf32, #tpu.memory_space<vmem>>, %arg3: memref<1x64xf32, #tpu.memory_space<vmem>>, %arg4: memref<8x64xf32, #tpu.memory_space<vmem>>, %arg5: memref<1xf32, #tpu.memory_space<smem>>, %arg6: memref<1x1x8xf32, #tpu.memory_space<vmem>>) attributes {dimension_semantics = [#tpu.dimension_semantics<parallel>], iteration_bounds = array<i64: 1>, scalar_prefetch = 0 : i64, scratch_operands = 0 : i64, tpu.core_type = #tpu.core_type<tc>, window_params = [{transform_indices = @transform_0, window_bounds = array<i64: 8, 115>}, {pipeline_mode = #tpu.pipeline_mode<synchronous>, transform_indices = @transform_1, window_bounds = array<i64: 115, 64>}, {pipeline_mode = #tpu.pipeline_mode<synchronous>, transform_indices = @transform_2, window_bounds = array<i64: 1, 64>}, {pipeline_mode = #tpu.pipeline_mode<synchronous>, transform_indices = @transform_3, window_bounds = array<i64: 8, 64>}, {transform_indices = @transform_4, window_bounds = array<i64: 1>}, {transform_indices = @transform_5, window_bounds = array<i64: 1, 1, 8>}]} {
    %c0 = arith.constant 0 : index
    %c0_0 = arith.constant 0 : index
    %0 = vector.load %arg1[%c0, %c0_0] : memref<8x115xf32, #tpu.memory_space<vmem>>, vector<8x115xf32>
    %c0_1 = arith.constant 0 : index
    %c0_2 = arith.constant 0 : index
    %1 = vector.load %arg2[%c0_1, %c0_2] : memref<115x64xf32, #tpu.memory_space<vmem>>, vector<115x64xf32>
    %cst = arith.constant dense<0.000000e+00> : vector<8x64xf32>
    %2 = tpu.matmul %0, %1, %cst {dimension_numbers = #tpu.dot_dimension_numbers<[1], [0], [0], [1], [0, 0, 1, 1], [], []>} : vector<8x115xf32>, vector<115x64xf32>, vector<8x64xf32> -> vector<8x64xf32>
    %c0_3 = arith.constant 0 : index
    %c0_4 = arith.constant 0 : index
    %3 = vector.load %arg3[%c0_3, %c0_4] : memref<1x64xf32, #tpu.memory_space<vmem>>, vector<1x64xf32>
    %4 = vector.broadcast %3 : vector<1x64xf32> to vector<8x64xf32>
    %5 = arith.addf %2, %4 : vector<8x64xf32>
    %cst_5 = arith.constant 0.000000e+00 : f32
    %6 = vector.broadcast %cst_5 : f32 to vector<8x64xf32>
    %7 = arith.maximumf %5, %6 : vector<8x64xf32>
    %c0_6 = arith.constant 0 : index
    %c0_7 = arith.constant 0 : index
    %8 = vector.load %arg4[%c0_6, %c0_7] : memref<8x64xf32, #tpu.memory_space<vmem>>, vector<8x64xf32>
    %cst_8 = arith.constant dense<0.000000e+00> : vector<8x8xf32>
    %9 = tpu.matmul %8, %7, %cst_8 {dimension_numbers = #tpu.dot_dimension_numbers<[1], [1], [0], [0], [0, 0, 1, 0], [], []>} : vector<8x64xf32>, vector<8x64xf32>, vector<8x8xf32> -> vector<8x8xf32>
    %10 = vector.extract_strided_slice %9 {offsets = [0, 0], sizes = [1, 8], strides = [1, 1]} : vector<8x8xf32> to vector<1x8xf32>
    %c0_9 = arith.constant 0 : index
    %11 = memref.load %arg5[%c0_9] : memref<1xf32, #tpu.memory_space<smem>>
    %12 = vector.broadcast %11 : f32 to vector<1x8xf32>
    %13 = arith.addf %10, %12 : vector<1x8xf32>
    %14 = vector.shape_cast %13 : vector<1x8xf32> to vector<1x1x8xf32>
    %c0_10 = arith.constant 0 : index
    %c0_11 = arith.constant 0 : index
    %c0_12 = arith.constant 0 : index
    %15 = vector.load %arg6[%c0_10, %c0_11, %c0_12] : memref<1x1x8xf32, #tpu.memory_space<vmem>>, vector<1x1x8xf32>
    tpu.vector_store %arg6[%c0_10, %c0_11, %c0_12], %14 {strides = array<i32>} : memref<1x1x8xf32, #tpu.memory_space<vmem>>, vector<1x1x8xf32>,
    return
  }
  func.func @transform_0(%arg0: i32) -> (i32, i32) {
    %c0_i32 = arith.constant 0 : i32
    %c0_i32_0 = arith.constant 0 : i32
    return %arg0, %c0_i32 : i32, i32
  }
  func.func @transform_1(%arg0: i32) -> (i32, i32) {
    %c0_i32 = arith.constant 0 : i32
    %c0_i32_0 = arith.constant 0 : i32
    %c0_i32_1 = arith.constant 0 : i32
    return %c0_i32, %c0_i32_0 : i32, i32
  }
  func.func @transform_2(%arg0: i32) -> (i32, i32) {
    %c0_i32 = arith.constant 0 : i32
    %c0_i32_0 = arith.constant 0 : i32
    %c0_i32_1 = arith.constant 0 : i32
    return %c0_i32, %c0_i32_0 : i32, i32
  }
  func.func @transform_3(%arg0: i32) -> (i32, i32) {
    %c0_i32 = arith.constant 0 : i32
    %c0_i32_0 = arith.constant 0 : i32
    %c0_i32_1 = arith.constant 0 : i32
    return %c0_i32, %c0_i32_0 : i32, i32
  }
  func.func @transform_4(%arg0: i32) -> i32 {
    %c0_i32 = arith.constant 0 : i32
    %c0_i32_0 = arith.constant 0 : i32
    return %c0_i32 : i32
  }
  func.func @transform_5(%arg0: i32) -> (i32, i32, i32) {
    %c0_i32 = arith.constant 0 : i32
    %c0_i32_0 = arith.constant 0 : i32
    %c0_i32_1 = arith.constant 0 : i32
    return %arg0, %c0_i32, %c0_i32_0 : i32, i32, i32
  }
}

</mosaic_0001>

<llo_original>
// kernel: tpu_custom_call.1
$region0: #{tpu_custom_call.1}
  #allocation0 [shape = 'u32[]', space=smem, size = 0x4, offset = 0x4, fixed_abs, tag = 'smem constant byte address 0x4 - core index']
  #allocation1 [shape = 'u32[144,128]{1,0:T(1,128)}', space=vmem, size = 0x12000, scoped, tag = 'internal scratch']
  #allocation2 [shape = 'f32[1]{0:T(128)S(6)}', space=smem, size = 0x200, scoped, tag = 'scoped memory for tpu_custom_call.1']
  %s0 = inlined_call_operand.vmem [shape: f32[8,115], index: 0, kind: input, shape index: {}]
  %s1 = inlined_call_operand.vmem [shape: f32[115,64], index: 1, kind: input, shape index: {}]
  %s2 = inlined_call_operand.vmem [shape: f32[1,64], index: 2, kind: input, shape index: {}]
  %s3 = inlined_call_operand.vmem [shape: f32[8,64], index: 3, kind: input, shape index: {}]
  %s4 = inlined_call_operand.<no memory space> [shape: f32[1], index: 4, kind: input, shape index: {}]
  %s5 = inlined_call_operand.hbm [shape: f32[1,1,8], index: 5, kind: output, shape index: {}]
  %s6 = sld [smem:[#allocation0]]
  $region30: #{tpu_custom_call.1} parent=0
    _
  %s8 = ssub.s32 1, %s6
  %s9 = scalar_select 0, %s8, %s6
  %10 = sst [smem:[#allocation2]] %s4
  $region1: #{tpu_custom_call.1} parent=0
    #allocation3 [shape = 'u8[512]{0}', space=vmem, size = 0x400, scoped, tag = 'output window, operand 0, single buffered']
    #allocation4 [shape = 's32[1]{0}', space=sflag, size = 0x4, scoped, tag = 'scoped memory for tpu_custom_call.1']
    %11 = vsyncpa [#allocation4], 0
    // Predicated region
    $region2: #{tpu_custom_call.1} parent=1 // pred_check
      _
    $region3: #{tpu_custom_call.1} parent=1 // pred_check_branch
      %13 = sbr.rel (0) target = $region5
    $region4: #{tpu_custom_call.1} parent=1 // pred_region
      _
    $region5: #{tpu_custom_call.1} parent=1 // pred_fallthru
      _
    // Predicated region
    $region6: #{tpu_custom_call.1} parent=1 // pred_check
      _
    $region7: #{tpu_custom_call.1} parent=1 // pred_check_branch
      %15 = sbr.rel (0) target = $region9
    $region8: #{tpu_custom_call.1} parent=1 // pred_region
      _
    $region9: #{tpu_custom_call.1} parent=1 // pred_fallthru
      _
    // Predicated region
    $region10: #{tpu_custom_call.1} parent=1 // pred_check
      _
    $region11: #{tpu_custom_call.1} parent=1 // pred_check_branch
      %17 = sbr.rel (0) target = $region13
    $region12: #{tpu_custom_call.1} parent=1 // pred_region
      _
    $region13: #{tpu_custom_call.1} parent=1 // pred_fallthru
      _
    // Predicated region
    $region14: #{tpu_custom_call.1} parent=1 // pred_check
      _
    $region15: #{tpu_custom_call.1} parent=1 // pred_check_branch
      %19 = sbr.rel (0) target = $region17
    $region16: #{tpu_custom_call.1} parent=1 // pred_region
      _
    $region17: #{tpu_custom_call.1} parent=1 // pred_fallthru
      _
    // Predicated region
    $region18: #{tpu_custom_call.1} parent=1 // pred_check
      _
    $region19: #{tpu_custom_call.1} parent=1 // pred_check_branch
      %21 = sbr.rel (0) target = $region21
    $region20: #{tpu_custom_call.1} parent=1 // pred_region
      _
    $region21: #{tpu_custom_call.1} parent=1 // pred_fallthru
      _
    %v22 = vld [vmem:[%s0] sm:$0xff]
    %v23 = vld [vmem:[%s1] sm:$0xff]
    %v24 = vld [vmem:[%s1 + $0x8] sm:$0xff]
    %v25 = vld [vmem:[%s1 + $0x10] sm:$0xff]
    %v26 = vld [vmem:[%s1 + $0x18] sm:$0xff]
    %v27 = vld [vmem:[%s1 + $0x20] sm:$0xff]
    %v28 = vld [vmem:[%s1 + $0x28] sm:$0xff]
    %v29 = vld [vmem:[%s1 + $0x30] sm:$0xff]
    %v30 = vld [vmem:[%s1 + $0x38] sm:$0xff]
    %v31 = vld [vmem:[%s1 + $0x40] sm:$0xff]
    %v32 = vld [vmem:[%s1 + $0x48] sm:$0xff]
    %v33 = vld [vmem:[%s1 + $0x50] sm:$0xff]
    %v34 = vld [vmem:[%s1 + $0x58] sm:$0xff]
    %v35 = vld [vmem:[%s1 + $0x60] sm:$0xff]
    %v36 = vld [vmem:[%s1 + $0x68] sm:$0xff]
    %v37 = vld [vmem:[%s1 + $0x70] sm:$0x7]
    %v38 = vld [vmem:[%s2] sm:$0x1]
    %v40 = vlaneseq
    %v41 = vshrl.u32 %v40, 7
    %v42 = vsub.s32 0, %v41
    %v43 = vrot.slane %v38, %v42
    %vm45 = vcmask 941056
    %v47 = vsel %vm45, %v22, 0
    %vm49 = vcmask 1042432
    %v51 = vsel %vm49, %v37, 0
    %53 = vmatprep.subr.mxu0 0.0
    %54 = vmatpush1.msra.mxu0 %v23
    %55 = vmatprep.subr.mxu0 0.0
    %56 = vmatpush1.msra.mxu0 %v24
    %57 = vmatprep.subr.mxu0 0.0
    %58 = vmatpush1.msra.mxu0 %v25
    %59 = vmatprep.subr.mxu0 0.0
    %60 = vmatpush1.msra.mxu0 %v26
    %61 = vmatprep.subr.mxu0 0.0
    %62 = vmatpush1.msra.mxu0 %v27
    %63 = vmatprep.subr.mxu0 0.0
    %64 = vmatpush1.msra.mxu0 %v28
    %65 = vmatprep.subr.mxu0 0.0
    %66 = vmatpush1.msra.mxu0 %v29
    %67 = vmatprep.subr.mxu0 0.0
    %68 = vmatpush1.msra.mxu0 %v30
    %69 = vmatprep.subr.mxu0 0.0
    %70 = vmatpush1.msra.mxu0 %v31
    %71 = vmatprep.subr.mxu0 0.0
    %72 = vmatpush1.msra.mxu0 %v32
    %73 = vmatprep.subr.mxu0 0.0
    %74 = vmatpush1.msra.mxu0 %v33
    %75 = vmatprep.subr.mxu0 0.0
    %76 = vmatpush1.msra.mxu0 %v34
    %77 = vmatprep.subr.mxu0 0.0
    %78 = vmatpush1.msra.mxu0 %v35
    %79 = vmatprep.subr.mxu0 0.0
    %80 = vmatpush1.msra.mxu0 %v36
    %81 = vmatprep.subr.mxu0 0.0
    %82 = vmatpush1.msra.mxu0 %v51
    %83 = vmatprep.subr.mxu0 0.0
    %84 = vmatpush1.msra.mxu0 0.0
    %85 = vmatprep.subr.mxu0 0.0
    %86 = vmatpush1.msra.mxu0 0.0
    %87 = vmatprep.subr.mxu0 0.0
    %88 = vmatpush1.msra.mxu0 0.0
    %89 = vmatprep.subr.mxu0 0.0
    %90 = vmatpush1.msra.mxu0 0.0
    %91 = vmatprep.subr.mxu0 0.0
    %92 = vmatpush1.msra.mxu0 0.0
    %93 = vmatprep.subr.mxu0 0.0
    %94 = vmatpush1.msra.mxu0 0.0
    %95 = vmatprep.subr.mxu0 0.0
    %96 = vmatpush1.msra.mxu0 0.0
    %97 = vmatprep.subr.mxu0 0.0
    %98 = vmatpush1.msra.mxu0 0.0
    %99 = vmatprep.subr.mxu0 0.0
    %100 = vmatpush1.msra.mxu0 0.0
    %101 = vmatprep.subr.mxu0 0.0
    %102 = vmatpush1.msra.mxu0 0.0
    %103 = vmatprep.subr.mxu0 0.0
    %104 = vmatpush1.msra.mxu0 0.0
    %105 = vmatprep.subr.mxu0 0.0
    %106 = vmatpush1.msra.mxu0 0.0
    %107 = vmatprep.subr.mxu0 0.0
    %108 = vmatpush1.msra.mxu0 0.0
    %109 = vmatprep.subr.mxu0 0.0
    %110 = vmatpush1.msra.mxu0 0.0
    %111 = vmatprep.subr.mxu0 0.0
    %112 = vmatpush1.msra.mxu0 0.0
    %113 = vmatprep.subr.mxu0 0.0
    %114 = vmatpush1.msra.mxu0 0.0
    %115 = vmatprep.subr.mxu0 0.0
    %116 = vmatpush1.msra.mxu0 0.0
    %117 = vmatprep.mubr.f32.mxu0 0.0
    %118 = vmatmul.mubr.f32.gmra.mrb[0].mxu0 %v47
    %v119 = vpop.f32.mrb[0].mxu0
    %v120 = vadd.f32 %v43, %v119
    %v121 = vpop.f32.mrb[0].mxu0
    %122 = vdwg.mxu0
    %v123 = vmax.f32 %v120, 0.0
    %v124 = vld [vmem:[%s3] sm:$0xff]
    %vm125 = vcmask 523264
    %v127 = vsel %vm125, %v124, 0
    %v130 = vsel %vm125, %v123, 0
    %132 = vmatprep.subr.mxu0 0.0
    %133 = vmatpush1.xpose.msra.mxu0 %v130
    %134 = vmatprep.subr.mxu0 0.0
    %135 = vmatpush1.xpose.msra.mxu0 0.0
    %136 = vmatprep.subr.mxu0 0.0
    %137 = vmatpush1.xpose.msra.mxu0 0.0
    %138 = vmatprep.subr.mxu0 0.0
    %139 = vmatpush1.xpose.msra.mxu0 0.0
    %140 = vmatprep.subr.mxu0 0.0
    %141 = vmatpush1.xpose.msra.mxu0 0.0
    %142 = vmatprep.subr.mxu0 0.0
    %143 = vmatpush1.xpose.msra.mxu0 0.0
    %144 = vmatprep.subr.mxu0 0.0
    %145 = vmatpush1.xpose.msra.mxu0 0.0
    %146 = vmatprep.subr.mxu0 0.0
    %147 = vmatpush1.xpose.msra.mxu0 0.0
    %148 = vmatprep.subr.mxu0 0.0
    %149 = vmatpush1.xpose.msra.mxu0 0.0
    %150 = vmatprep.subr.mxu0 0.0
    %151 = vmatpush1.xpose.msra.mxu0 0.0
    %152 = vmatprep.subr.mxu0 0.0
    %153 = vmatpush1.xpose.msra.mxu0 0.0
    %154 = vmatprep.subr.mxu0 0.0
    %155 = vmatpush1.xpose.msra.mxu0 0.0
    %156 = vmatprep.subr.mxu0 0.0
    %157 = vmatpush1.xpose.msra.mxu0 0.0
    %158 = vmatprep.subr.mxu0 0.0
    %159 = vmatpush1.xpose.msra.mxu0 0.0
    %160 = vmatprep.subr.mxu0 0.0
    %161 = vmatpush1.xpose.msra.mxu0 0.0
    %162 = vmatprep.subr.mxu0 0.0
    %163 = vmatpush1.xpose.msra.mxu0 0.0
    %164 = vmatprep.subr.mxu0 0.0
    %165 = vmatpush1.xpose.msra.mxu0 0.0
    %166 = vmatprep.subr.mxu0 0.0
    %167 = vmatpush1.xpose.msra.mxu0 0.0
    %168 = vmatprep.subr.mxu0 0.0
    %169 = vmatpush1.xpose.msra.mxu0 0.0
    %170 = vmatprep.subr.mxu0 0.0
    %171 = vmatpush1.xpose.msra.mxu0 0.0
    %172 = vmatprep.subr.mxu0 0.0
    %173 = vmatpush1.xpose.msra.mxu0 0.0
    %174 = vmatprep.subr.mxu0 0.0
    %175 = vmatpush1.xpose.msra.mxu0 0.0
    %176 = vmatprep.subr.mxu0 0.0
    %177 = vmatpush1.xpose.msra.mxu0 0.0
    %178 = vmatprep.subr.mxu0 0.0
    %179 = vmatpush1.xpose.msra.mxu0 0.0
    %180 = vmatprep.subr.mxu0 0.0
    %181 = vmatpush1.xpose.msra.mxu0 0.0
    %182 = vmatprep.subr.mxu0 0.0
    %183 = vmatpush1.xpose.msra.mxu0 0.0
    %184 = vmatprep.subr.mxu0 0.0
    %185 = vmatpush1.xpose.msra.mxu0 0.0
    %186 = vmatprep.subr.mxu0 0.0
    %187 = vmatpush1.xpose.msra.mxu0 0.0
    %188 = vmatprep.subr.mxu0 0.0
    %189 = vmatpush1.xpose.msra.mxu0 0.0
    %190 = vmatprep.subr.mxu0 0.0
    %191 = vmatpush1.xpose.msra.mxu0 0.0
    %192 = vmatprep.subr.mxu0 0.0
    %193 = vmatpush1.xpose.msra.mxu0 0.0
    %194 = vmatprep.subr.mxu0 0.0
    %195 = vmatpush1.xpose.msra.mxu0 0.0
    %196 = vmatprep.mubr.f32.mxu0 0.0
    %197 = vmatmul.mubr.f32.gmra.mrb[0].mxu0 %v127
    %v198 = vpop.f32.mrb[0].mxu0
    %v199 = vadd.f32 0.0, %v198
    %v200 = vpop.f32.mrb[0].mxu0
    %201 = vdwg.mxu0
    %s202 = sld [smem:[#allocation2]]
    %v203 = vstv %s202
    %v204 = vadd.f32 %v199, %v203
    %vm205 = vcmask 57344
    %206 = vst.msk [vmem:[#allocation3] sm:$0x1] %vm205, %v204
    // Predicated region
    $region22: #{tpu_custom_call.1} parent=1 // pred_check
      _
    $region23: #{tpu_custom_call.1} parent=1 // pred_check_branch
      %208 = sbr.rel (0) target = $region25
    $region24: #{tpu_custom_call.1} parent=1 // pred_region
      %s210 = ssub.s32 16, 16
      %211 = vsyncadd [#allocation4], %s210
      %s213 = sshll.u32 [#allocation3], 4
      %s214 = int_to_ptr.vmem [resolvable:$true] %s213
      %216 = dma.vmem_to_hbm [thread:$0]  %s214, 16, %s5, [#allocation4]
    $region25: #{tpu_custom_call.1} parent=1 // pred_fallthru
      _
    // Predicated region
    $region26: #{tpu_custom_call.1} parent=1 // pred_check
      _
    $region27: #{tpu_custom_call.1} parent=1 // pred_check_branch
      %218 = sbr.rel (0) target = $region29
    $region28: #{tpu_custom_call.1} parent=1 // pred_region
      %219 = dma.done [#allocation4], 16
    $region29: #{tpu_custom_call.1} parent=1 // pred_fallthru
      _
    %220 = vsyncpa [#allocation4], 1

</llo_original>
